<compile_context>
chip_gen: v7x
topology: tpu7x:2x2x1
jax: 0.10.0
libtpu: 0.0.40
codegen_flags: <defaults>
</compile_context>

<pallas_src>
import jax
import jax.numpy as jnp
from jax import lax
from jax.experimental import pallas as pl
from jax.experimental.pallas import tpu as pltpu

_LANE = 128


def _svn_kernel(x_ref, w1t_ref, b1_ref, w2_ref, b2_ref, o_ref):
    # Layer 1 on the MXU, computed transposed (weight-stationary) so the batch
    # tile stays on lanes:  (hidden, obs) x (tm, obs) contracting obs -> (hidden, tm)
    h_t = lax.dot_general(
        w1t_ref[...], x_ref[...],
        dimension_numbers=(((1,), (1,)), ((), ())),
        preferred_element_type=jnp.float32)
    h_t = jnp.maximum(h_t + b1_ref[...], 0.0)            # + (hidden, 1) bias, ReLU
    # Layer 2 on VPU + sublane reduce: (hidden, tm) * (hidden, 1) summed over
    # sublanes -> lane-dense (1, tm).  No N=1 MXU matmul, no masked stores.
    v = jnp.sum(h_t * w2_ref[...], axis=0, keepdims=True)
    o_ref[...] = (v + b2_ref[0, 0]).astype(o_ref.dtype)   # b2 scalar from SMEM


def _round_up(n, m):
    return (n + m - 1) // m * m


def _pick_batch_tile(B, obs, hidden, max_tile, vmem_budget_bytes):
    """Pick a lane-aligned batch tile from a padding-aware VMEM estimate."""
    # Per-batch-row VMEM bytes, including layout padding:
    #   x block   : 2 buffers x (tm, obs) f32, last dim lane-padded to 128
    #   out block : 2 buffers x (1, tm)  f32, first dim sublane-padded to 8
    #   hidden    : (hidden, tm) f32 temporary (h_T)
    per_row = 2 * _round_up(obs, _LANE) * 4 + 2 * 8 * 4 + hidden * 4
    # Resident weight/bias blocks (double-buffered even though constant):
    #   W1 (hidden, obs) lane-padded, plus b1 and w2 columns lane-padded to 128.
    fixed = 2 * 4 * (hidden * _round_up(obs, _LANE) + 2 * hidden * _LANE)
    tm_cap = max(_LANE, ((vmem_budget_bytes - fixed) // per_row) // _LANE * _LANE)
    tm_cap = min(tm_cap, max(_LANE, max_tile // _LANE * _LANE))
    # >= 2 grid steps whenever B spans more than one lane-tile, so the
    # ("parallel",) batch axis can shard across v7x's two TensorCores.
    n_tiles = max(2, pl.cdiv(B, tm_cap)) if B > _LANE else 1
    tm = min(tm_cap, _round_up(pl.cdiv(B, n_tiles), _LANE))
    return tm


def state_value_network(x, w1, b1, w2, b2, *, max_tile=8192,
                        vmem_budget_bytes=10 * 1024 * 1024, use_bf16=False):
    """Forward pass of StateValueNetwork.

    x : (B, obs)       float32
    w1: (hidden, obs)  float32   (PyTorch input_layer.weight layout)
    b1: (hidden,)      float32
    w2: (1, hidden)    float32   (PyTorch output_layer.weight layout)
    b2: (1,)           float32
    returns (B, 1) float32
    """
    B, obs = x.shape
    hidden = w1.shape[0]

    b1c = b1.reshape(hidden, 1).astype(jnp.float32)   # bias column for h_T
    w2c = w2.reshape(hidden, 1).astype(jnp.float32)   # projection column (= w2^T)
    b2s = b2.reshape(1, 1).astype(jnp.float32)        # scalar, lives in SMEM

    compute_dtype = jnp.bfloat16 if use_bf16 else x.dtype
    xk = x.astype(compute_dtype)
    w1k = w1.astype(compute_dtype)

    tm = _pick_batch_tile(B, obs, hidden, max_tile, vmem_budget_bytes)
    Bp = _round_up(B, tm)           # padding is < one (minimally sized) tile
    if Bp != B:
        xk = jnp.pad(xk, ((0, Bp - B), (0, 0)))

    out = pl.pallas_call(
        _svn_kernel,
        out_shape=jax.ShapeDtypeStruct((1, Bp), jnp.float32),
        grid_spec=pltpu.PrefetchScalarGridSpec(
            num_scalar_prefetch=0,
            grid=(Bp // tm,),
            in_specs=[
                pl.BlockSpec((tm, obs), lambda i: (i, 0)),          # x: streamed
                pl.BlockSpec((hidden, obs), lambda i: (0, 0)),      # W1: resident
                pl.BlockSpec((hidden, 1), lambda i: (0, 0)),        # b1 col: resident
                pl.BlockSpec((hidden, 1), lambda i: (0, 0)),        # w2 col: resident
                pl.BlockSpec(memory_space=pltpu.MemorySpace.SMEM),  # b2 scalar
            ],
            out_specs=pl.BlockSpec((1, tm), lambda i: (0, i)),      # lane-dense row
        ),
        compiler_params=pltpu.CompilerParams(
            dimension_semantics=("parallel",),   # batch tiles across TCs on v7x
        ),
    )(xk, w1k, b1c, w2c, b2s)

    return out[0, :B].reshape(B, 1)


def init_params(key, observation_space, hidden=128):
    """PyTorch nn.Linear-style U(-1/sqrt(fan_in), 1/sqrt(fan_in)) init, PyTorch layouts."""
    k1, k2, k3, k4 = jax.random.split(key, 4)
    bound1 = 1.0 / jnp.sqrt(observation_space)
    bound2 = 1.0 / jnp.sqrt(hidden)
    w1 = jax.random.uniform(k1, (hidden, observation_space), jnp.float32, -bound1, bound1)
    b1 = jax.random.uniform(k2, (hidden,), jnp.float32, -bound1, bound1)
    w2 = jax.random.uniform(k3, (1, hidden), jnp.float32, -bound2, bound2)
    b2 = jax.random.uniform(k4, (1,), jnp.float32, -bound2, bound2)
    return w1, b1, w2, b2


def _ref(x, w1, b1, w2, b2):
    h = jnp.maximum(jnp.dot(x, w1.T, precision=lax.Precision.HIGHEST) + b1, 0.0)
    return jnp.dot(h, w2.T, precision=lax.Precision.HIGHEST) + b2


if __name__ == "__main__":
    observation_space = 32
    key = jax.random.PRNGKey(0)
    kx, kp, kx2 = jax.random.split(key, 3)
    w1, b1, w2, b2 = init_params(kp, observation_space)

    # Small case (B=2): single 128-row tile, exercises batch padding to the lane granule.
    x = jax.random.normal(kx, (2, observation_space), jnp.float32)
    out = jax.block_until_ready(state_value_network(x, w1, b1, w2, b2))
    assert out.shape == (2, 1)
    assert jnp.allclose(out, _ref(x, w1, b1, w2, b2), atol=1e-5, rtol=1e-5)

    # Multi-tile case with a forced small tile: exercises the multi-step
    # ("parallel") batch grid and the ragged-tail padding path.
    x2 = jax.random.normal(kx2, (300, observation_space), jnp.float32)
    out2 = jax.block_until_ready(state_value_network(x2, w1, b1, w2, b2, max_tile=128))
    assert out2.shape == (300, 1)
    assert jnp.allclose(out2, _ref(x2, w1, b1, w2, b2), atol=1e-5, rtol=1e-5)

    # Optional bf16 streaming path (x / W1 in bf16, f32 accumulation).
    out3 = jax.block_until_ready(state_value_network(x2, w1, b1, w2, b2, use_bf16=True))
    assert out3.shape == (300, 1)
    assert jnp.allclose(out3, _ref(x2, w1, b1, w2, b2), atol=3e-2, rtol=3e-2)

    print("KERNEL_OK")
</pallas_src>

<mosaic_0001>
module attributes {stable_mosaic.version = 11 : i64} {
  func.func @_svn_kernel(%arg0: i32, %arg1: memref<128x32xf32, #tpu.memory_space<vmem>>, %arg2: memref<128x32xf32, #tpu.memory_space<vmem>>, %arg3: memref<128x1xf32, #tpu.memory_space<vmem>>, %arg4: memref<128x1xf32, #tpu.memory_space<vmem>>, %arg5: memref<1x1xf32, #tpu.memory_space<smem>>, %arg6: memref<1x128xf32, #tpu.memory_space<vmem>>) attributes {dimension_semantics = [#tpu.dimension_semantics<parallel>], iteration_bounds = array<i64: 1>, scalar_prefetch = 0 : i64, scratch_operands = 0 : i64, tpu.core_type = #tpu.core_type<tc>, window_params = [{transform_indices = @transform_0, window_bounds = array<i64: 128, 32>}, {pipeline_mode = #tpu.pipeline_mode<synchronous>, transform_indices = @transform_1, window_bounds = array<i64: 128, 32>}, {pipeline_mode = #tpu.pipeline_mode<synchronous>, transform_indices = @transform_2, window_bounds = array<i64: 128, 1>}, {pipeline_mode = #tpu.pipeline_mode<synchronous>, transform_indices = @transform_3, window_bounds = array<i64: 128, 1>}, {transform_indices = @transform_4, window_bounds = array<i64: 1, 1>}, {transform_indices = @transform_5, window_bounds = array<i64: 1, 128>}]} {
    %c0 = arith.constant 0 : index
    %c0_0 = arith.constant 0 : index
    %0 = vector.load %arg2[%c0, %c0_0] : memref<128x32xf32, #tpu.memory_space<vmem>>, vector<128x32xf32>
    %c0_1 = arith.constant 0 : index
    %c0_2 = arith.constant 0 : index
    %1 = vector.load %arg1[%c0_1, %c0_2] : memref<128x32xf32, #tpu.memory_space<vmem>>, vector<128x32xf32>
    %cst = arith.constant dense<0.000000e+00> : vector<128x128xf32>
    %2 = tpu.matmul %0, %1, %cst {dimension_numbers = #tpu.dot_dimension_numbers<[1], [1], [0], [0], [0, 0, 1, 0], [], []>} : vector<128x32xf32>, vector<128x32xf32>, vector<128x128xf32> -> vector<128x128xf32>
    %c0_3 = arith.constant 0 : index
    %c0_4 = arith.constant 0 : index
    %3 = vector.load %arg3[%c0_3, %c0_4] : memref<128x1xf32, #tpu.memory_space<vmem>>, vector<128x1xf32>
    %4 = vector.broadcast %3 : vector<128x1xf32> to vector<128x128xf32>
    %5 = arith.addf %2, %4 : vector<128x128xf32>
    %cst_5 = arith.constant 0.000000e+00 : f32
    %6 = vector.broadcast %cst_5 : f32 to vector<128x128xf32>
    %7 = arith.maximumf %5, %6 : vector<128x128xf32>
    %c0_6 = arith.constant 0 : index
    %c0_7 = arith.constant 0 : index
    %8 = vector.load %arg4[%c0_6, %c0_7] : memref<128x1xf32, #tpu.memory_space<vmem>>, vector<128x1xf32>
    %9 = vector.broadcast %8 : vector<128x1xf32> to vector<128x128xf32>
    %10 = arith.mulf %7, %9 : vector<128x128xf32>
    %cst_8 = arith.constant dense<0.000000e+00> : vector<128xf32>
    %11 = vector.multi_reduction <add>, %10, %cst_8 [0] : vector<128x128xf32> to vector<128xf32>
    %12 = vector.shape_cast %11 : vector<128xf32> to vector<1x128xf32>
    %c0_9 = arith.constant 0 : index
    %c0_10 = arith.constant 0 : index
    %13 = memref.load %arg5[%c0_9, %c0_10] : memref<1x1xf32, #tpu.memory_space<smem>>
    %14 = vector.broadcast %13 : f32 to vector<1x128xf32>
    %15 = arith.addf %12, %14 : vector<1x128xf32>
    %c0_11 = arith.constant 0 : index
    %c0_12 = arith.constant 0 : index
    %16 = vector.load %arg6[%c0_11, %c0_12] : memref<1x128xf32, #tpu.memory_space<vmem>>, vector<1x128xf32>
    tpu.vector_store %arg6[%c0_11, %c0_12], %15 {strides = array<i32>} : memref<1x128xf32, #tpu.memory_space<vmem>>, vector<1x128xf32>,
    return
  }
  func.func @transform_0(%arg0: i32) -> (i32, i32) {
    %c0_i32 = arith.constant 0 : i32
    %c0_i32_0 = arith.constant 0 : i32
    return %arg0, %c0_i32 : i32, i32
  }
  func.func @transform_1(%arg0: i32) -> (i32, i32) {
    %c0_i32 = arith.constant 0 : i32
    %c0_i32_0 = arith.constant 0 : i32
    %c0_i32_1 = arith.constant 0 : i32
    return %c0_i32, %c0_i32_0 : i32, i32
  }
  func.func @transform_2(%arg0: i32) -> (i32, i32) {
    %c0_i32 = arith.constant 0 : i32
    %c0_i32_0 = arith.constant 0 : i32
    %c0_i32_1 = arith.constant 0 : i32
    return %c0_i32, %c0_i32_0 : i32, i32
  }
  func.func @transform_3(%arg0: i32) -> (i32, i32) {
    %c0_i32 = arith.constant 0 : i32
    %c0_i32_0 = arith.constant 0 : i32
    %c0_i32_1 = arith.constant 0 : i32
    return %c0_i32, %c0_i32_0 : i32, i32
  }
  func.func @transform_4(%arg0: i32) -> (i32, i32) {
    %c0_i32 = arith.constant 0 : i32
    %c0_i32_0 = arith.constant 0 : i32
    %c0_i32_1 = arith.constant 0 : i32
    return %c0_i32, %c0_i32_0 : i32, i32
  }
  func.func @transform_5(%arg0: i32) -> (i32, i32) {
    %c0_i32 = arith.constant 0 : i32
    %c0_i32_0 = arith.constant 0 : i32
    return %c0_i32, %arg0 : i32, i32
  }
}

</mosaic_0001>

<llo_original>
// kernel: tpu_custom_call.1
$region0: #{tpu_custom_call.1}
  #allocation0 [shape = 'u32[]', space=smem, size = 0x4, offset = 0x4, fixed_abs, tag = 'smem constant byte address 0x4 - core index']
  #allocation1 [shape = 'u32[144,128]{1,0:T(1,128)}', space=vmem, size = 0x12000, scoped, tag = 'internal scratch']
  #allocation2 [shape = 'f32[1,1]{1,0:T(1,128)S(6)}', space=smem, size = 0x200, scoped, tag = 'scoped memory for tpu_custom_call.1']
  %s0 = inlined_call_operand.vmem [shape: f32[128,32], index: 0, kind: input, shape index: {}]
  %s1 = inlined_call_operand.vmem [shape: f32[128,32], index: 1, kind: input, shape index: {}]
  %s2 = inlined_call_operand.vmem [shape: f32[128,1], index: 2, kind: input, shape index: {}]
  %s3 = inlined_call_operand.vmem [shape: f32[128,1], index: 3, kind: input, shape index: {}]
  %s4 = inlined_call_operand.<no memory space> [shape: f32[1,1], index: 4, kind: input, shape index: {}]
  %s5 = inlined_call_operand.hbm [shape: f32[1,128], index: 5, kind: output, shape index: {}]
  %s6 = sld [smem:[#allocation0]]
  $region30: #{tpu_custom_call.1} parent=0
    _
  %s8 = ssub.s32 1, %s6
  %s9 = scalar_select 0, %s8, %s6
  %10 = sst [smem:[#allocation2]] %s4
  $region1: #{tpu_custom_call.1} parent=0
    #allocation3 [shape = 'u8[512]{0}', space=vmem, size = 0x400, scoped, tag = 'output window, operand 0, single buffered']
    #allocation4 [shape = 's32[1]{0}', space=sflag, size = 0x4, scoped, tag = 'scoped memory for tpu_custom_call.1']
    %11 = vsyncpa [#allocation4], 0
    // Predicated region
    $region2: #{tpu_custom_call.1} parent=1 // pred_check
      _
    $region3: #{tpu_custom_call.1} parent=1 // pred_check_branch
      %13 = sbr.rel (0) target = $region5
    $region4: #{tpu_custom_call.1} parent=1 // pred_region
      _
    $region5: #{tpu_custom_call.1} parent=1 // pred_fallthru
      _
    // Predicated region
    $region6: #{tpu_custom_call.1} parent=1 // pred_check
      _
    $region7: #{tpu_custom_call.1} parent=1 // pred_check_branch
      %15 = sbr.rel (0) target = $region9
    $region8: #{tpu_custom_call.1} parent=1 // pred_region
      _
    $region9: #{tpu_custom_call.1} parent=1 // pred_fallthru
      _
    // Predicated region
    $region10: #{tpu_custom_call.1} parent=1 // pred_check
      _
    $region11: #{tpu_custom_call.1} parent=1 // pred_check_branch
      %17 = sbr.rel (0) target = $region13
    $region12: #{tpu_custom_call.1} parent=1 // pred_region
      _
    $region13: #{tpu_custom_call.1} parent=1 // pred_fallthru
      _
    // Predicated region
    $region14: #{tpu_custom_call.1} parent=1 // pred_check
      _
    $region15: #{tpu_custom_call.1} parent=1 // pred_check_branch
      %19 = sbr.rel (0) target = $region17
    $region16: #{tpu_custom_call.1} parent=1 // pred_region
      _
    $region17: #{tpu_custom_call.1} parent=1 // pred_fallthru
      _
    // Predicated region
    $region18: #{tpu_custom_call.1} parent=1 // pred_check
      _
    $region19: #{tpu_custom_call.1} parent=1 // pred_check_branch
      %21 = sbr.rel (0) target = $region21
    $region20: #{tpu_custom_call.1} parent=1 // pred_region
      _
    $region21: #{tpu_custom_call.1} parent=1 // pred_fallthru
      _
    %v22 = vld [vmem:[%s1] sm:$0xff]
    %v23 = vld [vmem:[%s1 + $0x8] sm:$0xff]
    %v24 = vld [vmem:[%s1 + $0x10] sm:$0xff]
    %v25 = vld [vmem:[%s1 + $0x18] sm:$0xff]
    %v26 = vld [vmem:[%s1 + $0x20] sm:$0xff]
    %v27 = vld [vmem:[%s1 + $0x28] sm:$0xff]
    %v28 = vld [vmem:[%s1 + $0x30] sm:$0xff]
    %v29 = vld [vmem:[%s1 + $0x38] sm:$0xff]
    %v30 = vld [vmem:[%s1 + $0x40] sm:$0xff]
    %v31 = vld [vmem:[%s1 + $0x48] sm:$0xff]
    %v32 = vld [vmem:[%s1 + $0x50] sm:$0xff]
    %v33 = vld [vmem:[%s1 + $0x58] sm:$0xff]
    %v34 = vld [vmem:[%s1 + $0x60] sm:$0xff]
    %v35 = vld [vmem:[%s1 + $0x68] sm:$0xff]
    %v36 = vld [vmem:[%s1 + $0x70] sm:$0xff]
    %v37 = vld [vmem:[%s1 + $0x78] sm:$0xff]
    %v38 = vld [vmem:[%s0] sm:$0xff]
    %v39 = vld [vmem:[%s0 + $0x8] sm:$0xff]
    %v40 = vld [vmem:[%s0 + $0x10] sm:$0xff]
    %v41 = vld [vmem:[%s0 + $0x18] sm:$0xff]
    %v42 = vld [vmem:[%s0 + $0x20] sm:$0xff]
    %v43 = vld [vmem:[%s0 + $0x28] sm:$0xff]
    %v44 = vld [vmem:[%s0 + $0x30] sm:$0xff]
    %v45 = vld [vmem:[%s0 + $0x38] sm:$0xff]
    %v46 = vld [vmem:[%s0 + $0x40] sm:$0xff]
    %v47 = vld [vmem:[%s0 + $0x48] sm:$0xff]
    %v48 = vld [vmem:[%s0 + $0x50] sm:$0xff]
    %v49 = vld [vmem:[%s0 + $0x58] sm:$0xff]
    %v50 = vld [vmem:[%s0 + $0x60] sm:$0xff]
    %v51 = vld [vmem:[%s0 + $0x68] sm:$0xff]
    %v52 = vld [vmem:[%s0 + $0x70] sm:$0xff]
    %v53 = vld [vmem:[%s0 + $0x78] sm:$0xff]
    %v54 = vld [vmem:[%s2] sm:$0xff]
    %v55 = vld [vmem:[%s2 + $0x8] sm:$0xff]
    %v56 = vld [vmem:[%s2 + $0x10] sm:$0xff]
    %v57 = vld [vmem:[%s2 + $0x18] sm:$0xff]
    %v58 = vld [vmem:[%s2 + $0x20] sm:$0xff]
    %v59 = vld [vmem:[%s2 + $0x28] sm:$0xff]
    %v60 = vld [vmem:[%s2 + $0x30] sm:$0xff]
    %v61 = vld [vmem:[%s2 + $0x38] sm:$0xff]
    %v62 = vld [vmem:[%s2 + $0x40] sm:$0xff]
    %v63 = vld [vmem:[%s2 + $0x48] sm:$0xff]
    %v64 = vld [vmem:[%s2 + $0x50] sm:$0xff]
    %v65 = vld [vmem:[%s2 + $0x58] sm:$0xff]
    %v66 = vld [vmem:[%s2 + $0x60] sm:$0xff]
    %v67 = vld [vmem:[%s2 + $0x68] sm:$0xff]
    %v68 = vld [vmem:[%s2 + $0x70] sm:$0xff]
    %v69 = vld [vmem:[%s2 + $0x78] sm:$0xff]
    %71 = vset.pattern.permute.xlu0 0
    %72 = vperm.xlu0 %71, %v54
    %v73 = vpop.permute.xlu0 %72
    %76 = vset.pattern.permute.xlu0 0
    %77 = vperm.xlu0 %76, %v55
    %v78 = vpop.permute.xlu0 %77
    %81 = vset.pattern.permute.xlu0 0
    %82 = vperm.xlu0 %81, %v56
    %v83 = vpop.permute.xlu0 %82
    %86 = vset.pattern.permute.xlu0 0
    %87 = vperm.xlu0 %86, %v57
    %v88 = vpop.permute.xlu0 %87
    %91 = vset.pattern.permute.xlu0 0
    %92 = vperm.xlu0 %91, %v58
    %v93 = vpop.permute.xlu0 %92
    %96 = vset.pattern.permute.xlu0 0
    %97 = vperm.xlu0 %96, %v59
    %v98 = vpop.permute.xlu0 %97
    %101 = vset.pattern.permute.xlu0 0
    %102 = vperm.xlu0 %101, %v60
    %v103 = vpop.permute.xlu0 %102
    %106 = vset.pattern.permute.xlu0 0
    %107 = vperm.xlu0 %106, %v61
    %v108 = vpop.permute.xlu0 %107
    %111 = vset.pattern.permute.xlu0 0
    %112 = vperm.xlu0 %111, %v62
    %v113 = vpop.permute.xlu0 %112
    %116 = vset.pattern.permute.xlu0 0
    %117 = vperm.xlu0 %116, %v63
    %v118 = vpop.permute.xlu0 %117
    %121 = vset.pattern.permute.xlu0 0
    %122 = vperm.xlu0 %121, %v64
    %v123 = vpop.permute.xlu0 %122
    %126 = vset.pattern.permute.xlu0 0
    %127 = vperm.xlu0 %126, %v65
    %v128 = vpop.permute.xlu0 %127
    %131 = vset.pattern.permute.xlu0 0
    %132 = vperm.xlu0 %131, %v66
    %v133 = vpop.permute.xlu0 %132
    %136 = vset.pattern.permute.xlu0 0
    %137 = vperm.xlu0 %136, %v67
    %v138 = vpop.permute.xlu0 %137
    %141 = vset.pattern.permute.xlu0 0
    %142 = vperm.xlu0 %141, %v68
    %v143 = vpop.permute.xlu0 %142
    %146 = vset.pattern.permute.xlu0 0
    %147 = vperm.xlu0 %146, %v69
    %v148 = vpop.permute.xlu0 %147
    %vm150 = vcmask 261120
    %v152 = vsel %vm150, %v22, 0
    %v155 = vsel %vm150, %v23, 0
    %v158 = vsel %vm150, %v24, 0
    %v161 = vsel %vm150, %v25, 0
    %v164 = vsel %vm150, %v26, 0
    %v167 = vsel %vm150, %v27, 0
    %v170 = vsel %vm150, %v28, 0
    %v173 = vsel %vm150, %v29, 0
    %v176 = vsel %vm150, %v30, 0
    %v179 = vsel %vm150, %v31, 0
    %v182 = vsel %vm150, %v32, 0
    %v185 = vsel %vm150, %v33, 0
    %v188 = vsel %vm150, %v34, 0
    %v191 = vsel %vm150, %v35, 0
    %v194 = vsel %vm150, %v36, 0
    %v197 = vsel %vm150, %v37, 0
    %v200 = vsel %vm150, %v38, 0
    %v203 = vsel %vm150, %v39, 0
    %v206 = vsel %vm150, %v40, 0
    %v209 = vsel %vm150, %v41, 0
    %v212 = vsel %vm150, %v42, 0
    %v215 = vsel %vm150, %v43, 0
    %v218 = vsel %vm150, %v44, 0
    %v221 = vsel %vm150, %v45, 0
    %v224 = vsel %vm150, %v46, 0
    %v227 = vsel %vm150, %v47, 0
    %v230 = vsel %vm150, %v48, 0
    %v233 = vsel %vm150, %v49, 0
    %v236 = vsel %vm150, %v50, 0
    %v239 = vsel %vm150, %v51, 0
    %v242 = vsel %vm150, %v52, 0
    %v245 = vsel %vm150, %v53, 0
    %247 = vmatprep.subr.mxu0 0.0
    %248 = vmatpush1.xpose.msra.mxu0 %v200
    %249 = vmatprep.subr.mxu0 0.0
    %250 = vmatpush1.xpose.msra.mxu0 %v203
    %251 = vmatprep.subr.mxu0 0.0
    %252 = vmatpush1.xpose.msra.mxu0 %v206
    %253 = vmatprep.subr.mxu0 0.0
    %254 = vmatpush1.xpose.msra.mxu0 %v209
    %255 = vmatprep.subr.mxu0 0.0
    %256 = vmatpush1.xpose.msra.mxu0 %v212
    %257 = vmatprep.subr.mxu0 0.0
    %258 = vmatpush1.xpose.msra.mxu0 %v215
    %259 = vmatprep.subr.mxu0 0.0
    %260 = vmatpush1.xpose.msra.mxu0 %v218
    %261 = vmatprep.subr.mxu0 0.0
    %262 = vmatpush1.xpose.msra.mxu0 %v221
    %263 = vmatprep.subr.mxu0 0.0
    %264 = vmatpush1.xpose.msra.mxu0 %v224
    %265 = vmatprep.subr.mxu0 0.0
    %266 = vmatpush1.xpose.msra.mxu0 %v227
    %267 = vmatprep.subr.mxu0 0.0
    %268 = vmatpush1.xpose.msra.mxu0 %v230
    %269 = vmatprep.subr.mxu0 0.0
    %270 = vmatpush1.xpose.msra.mxu0 %v233
    %271 = vmatprep.subr.mxu0 0.0
    %272 = vmatpush1.xpose.msra.mxu0 %v236
    %273 = vmatprep.subr.mxu0 0.0
    %274 = vmatpush1.xpose.msra.mxu0 %v239
    %275 = vmatprep.subr.mxu0 0.0
    %276 = vmatpush1.xpose.msra.mxu0 %v242
    %277 = vmatprep.subr.mxu0 0.0
    %278 = vmatpush1.xpose.msra.mxu0 %v245
    %279 = vmatprep.subr.mxu0 0.0
    %280 = vmatpush1.xpose.msra.mxu0 0.0
    %281 = vmatprep.subr.mxu0 0.0
    %282 = vmatpush1.xpose.msra.mxu0 0.0
    %283 = vmatprep.subr.mxu0 0.0
    %284 = vmatpush1.xpose.msra.mxu0 0.0
    %285 = vmatprep.subr.mxu0 0.0
    %286 = vmatpush1.xpose.msra.mxu0 0.0
    %287 = vmatprep.subr.mxu0 0.0
    %288 = vmatpush1.xpose.msra.mxu0 0.0
    %289 = vmatprep.subr.mxu0 0.0
    %290 = vmatpush1.xpose.msra.mxu0 0.0
    %291 = vmatprep.subr.mxu0 0.0
    %292 = vmatpush1.xpose.msra.mxu0 0.0
    %293 = vmatprep.subr.mxu0 0.0
    %294 = vmatpush1.xpose.msra.mxu0 0.0
    %295 = vmatprep.subr.mxu0 0.0
    %296 = vmatpush1.xpose.msra.mxu0 0.0
    %297 = vmatprep.subr.mxu0 0.0
    %298 = vmatpush1.xpose.msra.mxu0 0.0
    %299 = vmatprep.subr.mxu0 0.0
    %300 = vmatpush1.xpose.msra.mxu0 0.0
    %301 = vmatprep.subr.mxu0 0.0
    %302 = vmatpush1.xpose.msra.mxu0 0.0
    %303 = vmatprep.subr.mxu0 0.0
    %304 = vmatpush1.xpose.msra.mxu0 0.0
    %305 = vmatprep.subr.mxu0 0.0
    %306 = vmatpush1.xpose.msra.mxu0 0.0
    %307 = vmatprep.subr.mxu0 0.0
    %308 = vmatpush1.xpose.msra.mxu0 0.0
    %309 = vmatprep.subr.mxu0 0.0
    %310 = vmatpush1.xpose.msra.mxu0 0.0
    %311 = vmatprep.mubr.f32.mxu0 0.0
    %312 = vmatmul.mubr.f32.gmra.mrb[0].mxu0 %v152
    %v313 = vpop.f32.mrb[0].mxu0
    %v314 = vadd.f32 %v73, %v313
    %v315 = vpop.f32.mrb[0].mxu0
    %316 = vmatprep.mubr.f32.mxu0 0.0
    %317 = vmatmul.mubr.f32.gmra.mrb[0].mxu0 %v155
    %v318 = vpop.f32.mrb[0].mxu0
    %v319 = vadd.f32 %v78, %v318
    %v320 = vpop.f32.mrb[0].mxu0
    %321 = vmatprep.mubr.f32.mxu0 0.0
    %322 = vmatmul.mubr.f32.gmra.mrb[0].mxu0 %v158
    %v323 = vpop.f32.mrb[0].mxu0
    %v324 = vadd.f32 %v83, %v323
    %v325 = vpop.f32.mrb[0].mxu0
    %326 = vmatprep.mubr.f32.mxu0 0.0
    %327 = vmatmul.mubr.f32.gmra.mrb[0].mxu0 %v161
    %v328 = vpop.f32.mrb[0].mxu0
    %v329 = vadd.f32 %v88, %v328
    %v330 = vpop.f32.mrb[0].mxu0
    %331 = vmatprep.mubr.f32.mxu0 0.0
    %332 = vmatmul.mubr.f32.gmra.mrb[0].mxu0 %v164
    %v333 = vpop.f32.mrb[0].mxu0
    %v334 = vadd.f32 %v93, %v333
    %v335 = vpop.f32.mrb[0].mxu0
    %336 = vmatprep.mubr.f32.mxu0 0.0
    %337 = vmatmul.mubr.f32.gmra.mrb[0].mxu0 %v167
    %v338 = vpop.f32.mrb[0].mxu0
    %v339 = vadd.f32 %v98, %v338
    %v340 = vpop.f32.mrb[0].mxu0
    %341 = vmatprep.mubr.f32.mxu0 0.0
    %342 = vmatmul.mubr.f32.gmra.mrb[0].mxu0 %v170
    %v343 = vpop.f32.mrb[0].mxu0
    %v344 = vadd.f32 %v103, %v343
    %v345 = vpop.f32.mrb[0].mxu0
    %346 = vmatprep.mubr.f32.mxu0 0.0
    %347 = vmatmul.mubr.f32.gmra.mrb[0].mxu0 %v173
    %v348 = vpop.f32.mrb[0].mxu0
    %v349 = vadd.f32 %v108, %v348
    %v350 = vpop.f32.mrb[0].mxu0
    %351 = vmatprep.mubr.f32.mxu0 0.0
    %352 = vmatmul.mubr.f32.gmra.mrb[0].mxu0 %v176
    %v353 = vpop.f32.mrb[0].mxu0
    %v354 = vadd.f32 %v113, %v353
    %v355 = vpop.f32.mrb[0].mxu0
    %356 = vmatprep.mubr.f32.mxu0 0.0
    %357 = vmatmul.mubr.f32.gmra.mrb[0].mxu0 %v179
    %v358 = vpop.f32.mrb[0].mxu0
    %v359 = vadd.f32 %v118, %v358
    %v360 = vpop.f32.mrb[0].mxu0
    %361 = vmatprep.mubr.f32.mxu0 0.0
    %362 = vmatmul.mubr.f32.gmra.mrb[0].mxu0 %v182
    %v363 = vpop.f32.mrb[0].mxu0
    %v364 = vadd.f32 %v123, %v363
    %v365 = vpop.f32.mrb[0].mxu0
    %366 = vmatprep.mubr.f32.mxu0 0.0
    %367 = vmatmul.mubr.f32.gmra.mrb[0].mxu0 %v185
    %v368 = vpop.f32.mrb[0].mxu0
    %v369 = vadd.f32 %v128, %v368
    %v370 = vpop.f32.mrb[0].mxu0
    %371 = vmatprep.mubr.f32.mxu0 0.0
    %372 = vmatmul.mubr.f32.gmra.mrb[0].mxu0 %v188
    %v373 = vpop.f32.mrb[0].mxu0
    %v374 = vadd.f32 %v133, %v373
    %v375 = vpop.f32.mrb[0].mxu0
    %376 = vmatprep.mubr.f32.mxu0 0.0
    %377 = vmatmul.mubr.f32.gmra.mrb[0].mxu0 %v191
    %v378 = vpop.f32.mrb[0].mxu0
    %v379 = vadd.f32 %v138, %v378
    %v380 = vpop.f32.mrb[0].mxu0
    %381 = vmatprep.mubr.f32.mxu0 0.0
    %382 = vmatmul.mubr.f32.gmra.mrb[0].mxu0 %v194
    %v383 = vpop.f32.mrb[0].mxu0
    %v384 = vadd.f32 %v143, %v383
    %v385 = vpop.f32.mrb[0].mxu0
    %386 = vmatprep.mubr.f32.mxu0 0.0
    %387 = vmatmul.mubr.f32.gmra.mrb[0].mxu0 %v197
    %v388 = vpop.f32.mrb[0].mxu0
    %v389 = vadd.f32 %v148, %v388
    %v390 = vpop.f32.mrb[0].mxu0
    %391 = vdwg.mxu0
    %v392 = vmax.f32 %v314, 0.0
    %v393 = vmax.f32 %v319, 0.0
    %v394 = vmax.f32 %v324, 0.0
    %v395 = vmax.f32 %v329, 0.0
    %v396 = vmax.f32 %v334, 0.0
    %v397 = vmax.f32 %v339, 0.0
    %v398 = vmax.f32 %v344, 0.0
    %v399 = vmax.f32 %v349, 0.0
    %v400 = vmax.f32 %v354, 0.0
    %v401 = vmax.f32 %v359, 0.0
    %v402 = vmax.f32 %v364, 0.0
    %v403 = vmax.f32 %v369, 0.0
    %v404 = vmax.f32 %v374, 0.0
    %v405 = vmax.f32 %v379, 0.0
    %v406 = vmax.f32 %v384, 0.0
    %v407 = vmax.f32 %v389, 0.0
    %v408 = vld [vmem:[%s3] sm:$0xff]
    %v409 = vld [vmem:[%s3 + $0x8] sm:$0xff]
    %v410 = vld [vmem:[%s3 + $0x10] sm:$0xff]
    %v411 = vld [vmem:[%s3 + $0x18] sm:$0xff]
    %v412 = vld [vmem:[%s3 + $0x20] sm:$0xff]
    %v413 = vld [vmem:[%s3 + $0x28] sm:$0xff]
    %v414 = vld [vmem:[%s3 + $0x30] sm:$0xff]
    %v415 = vld [vmem:[%s3 + $0x38] sm:$0xff]
    %v416 = vld [vmem:[%s3 + $0x40] sm:$0xff]
    %v417 = vld [vmem:[%s3 + $0x48] sm:$0xff]
    %v418 = vld [vmem:[%s3 + $0x50] sm:$0xff]
    %v419 = vld [vmem:[%s3 + $0x58] sm:$0xff]
    %v420 = vld [vmem:[%s3 + $0x60] sm:$0xff]
    %v421 = vld [vmem:[%s3 + $0x68] sm:$0xff]
    %v422 = vld [vmem:[%s3 + $0x70] sm:$0xff]
    %v423 = vld [vmem:[%s3 + $0x78] sm:$0xff]
    %425 = vset.pattern.permute.xlu0 0
    %426 = vperm.xlu0 %425, %v408
    %v427 = vpop.permute.xlu0 %426
    %430 = vset.pattern.permute.xlu0 0
    %431 = vperm.xlu0 %430, %v409
    %v432 = vpop.permute.xlu0 %431
    %435 = vset.pattern.permute.xlu0 0
    %436 = vperm.xlu0 %435, %v410
    %v437 = vpop.permute.xlu0 %436
    %440 = vset.pattern.permute.xlu0 0
    %441 = vperm.xlu0 %440, %v411
    %v442 = vpop.permute.xlu0 %441
    %445 = vset.pattern.permute.xlu0 0
    %446 = vperm.xlu0 %445, %v412
    %v447 = vpop.permute.xlu0 %446
    %450 = vset.pattern.permute.xlu0 0
    %451 = vperm.xlu0 %450, %v413
    %v452 = vpop.permute.xlu0 %451
    %455 = vset.pattern.permute.xlu0 0
    %456 = vperm.xlu0 %455, %v414
    %v457 = vpop.permute.xlu0 %456
    %460 = vset.pattern.permute.xlu0 0
    %461 = vperm.xlu0 %460, %v415
    %v462 = vpop.permute.xlu0 %461
    %465 = vset.pattern.permute.xlu0 0
    %466 = vperm.xlu0 %465, %v416
    %v467 = vpop.permute.xlu0 %466
    %470 = vset.pattern.permute.xlu0 0
    %471 = vperm.xlu0 %470, %v417
    %v472 = vpop.permute.xlu0 %471
    %475 = vset.pattern.permute.xlu0 0
    %476 = vperm.xlu0 %475, %v418
    %v477 = vpop.permute.xlu0 %476
    %480 = vset.pattern.permute.xlu0 0
    %481 = vperm.xlu0 %480, %v419
    %v482 = vpop.permute.xlu0 %481
    %485 = vset.pattern.permute.xlu0 0
    %486 = vperm.xlu0 %485, %v420
    %v487 = vpop.permute.xlu0 %486
    %490 = vset.pattern.permute.xlu0 0
    %491 = vperm.xlu0 %490, %v421
    %v492 = vpop.permute.xlu0 %491
    %495 = vset.pattern.permute.xlu0 0
    %496 = vperm.xlu0 %495, %v422
    %v497 = vpop.permute.xlu0 %496
    %500 = vset.pattern.permute.xlu0 0
    %501 = vperm.xlu0 %500, %v423
    %v502 = vpop.permute.xlu0 %501
    %v504 = vmul.f32 %v392, %v427
    %v505 = vmul.f32 %v393, %v432
    %v506 = vmul.f32 %v394, %v437
    %v507 = vmul.f32 %v395, %v442
    %v508 = vmul.f32 %v396, %v447
    %v509 = vmul.f32 %v397, %v452
    %v510 = vmul.f32 %v398, %v457
    %v511 = vmul.f32 %v399, %v462
    %v512 = vmul.f32 %v400, %v467
    %v513 = vmul.f32 %v401, %v472
    %v514 = vmul.f32 %v402, %v477
    %v515 = vmul.f32 %v403, %v482
    %v516 = vmul.f32 %v404, %v487
    %v517 = vmul.f32 %v405, %v492
    %v518 = vmul.f32 %v406, %v497
    %v519 = vmul.f32 %v407, %v502
    %v520 = vadd.f32 %v504, %v505
    %v521 = vadd.f32 %v520, %v506
    %v522 = vadd.f32 %v521, %v507
    %v523 = vadd.f32 %v522, %v508
    %v524 = vadd.f32 %v523, %v509
    %v525 = vadd.f32 %v524, %v510
    %v526 = vadd.f32 %v525, %v511
    %v527 = vadd.f32 %v526, %v512
    %v528 = vadd.f32 %v527, %v513
    %v529 = vadd.f32 %v528, %v514
    %v530 = vadd.f32 %v529, %v515
    %v531 = vadd.f32 %v530, %v516
    %v532 = vadd.f32 %v531, %v517
    %v533 = vadd.f32 %v532, %v518
    %v534 = vadd.f32 %v533, %v519
    %v535 = vrot.slane %v534, 4
    %v536 = vadd.f32 %v534, %v535
    %v537 = vrot.slane %v536, 2
    %v538 = vadd.f32 %v536, %v537
    %v539 = vrot.slane %v538, 1
    %v540 = vadd.f32 %v538, %v539
    %s541 = sld [smem:[#allocation2]]
    %v542 = vstv %s541
    %v543 = vadd.f32 %v540, %v542
    %544 = vst [vmem:[#allocation3] sm:$0x1] %v543
    // Predicated region
    $region22: #{tpu_custom_call.1} parent=1 // pred_check
      _
    $region23: #{tpu_custom_call.1} parent=1 // pred_check_branch
      %546 = sbr.rel (0) target = $region25
    $region24: #{tpu_custom_call.1} parent=1 // pred_region
      %s548 = ssub.s32 16, 16
      %549 = vsyncadd [#allocation4], %s548
      %s551 = sshll.u32 [#allocation3], 4
      %s552 = int_to_ptr.vmem [resolvable:$true] %s551
      %554 = dma.vmem_to_hbm [thread:$0]  %s552, 16, %s5, [#allocation4]
    $region25: #{tpu_custom_call.1} parent=1 // pred_fallthru
      _
    // Predicated region
    $region26: #{tpu_custom_call.1} parent=1 // pred_check
      _
    $region27: #{tpu_custom_call.1} parent=1 // pred_check_branch
      %556 = sbr.rel (0) target = $region29
    $region28: #{tpu_custom_call.1} parent=1 // pred_region
      %557 = dma.done [#allocation4], 16
    $region29: #{tpu_custom_call.1} parent=1 // pred_fallthru
      _
    %558 = vsyncpa [#allocation4], 1

</llo_original>
